<compile_context>
chip_gen: v6e
topology: v6e:2x2x1
jax: 0.10.0
libtpu: 0.0.40
codegen_flags: <defaults>
</compile_context>

<pallas_src>
import jax
import jax.numpy as jnp
from jax import lax
from jax.experimental import pallas as pl
from jax.experimental.pallas import tpu as pltpu


def _round_up(x, m):
    return (x + m - 1) // m * m


def _pick_batch_tile(batch):
    """MXU-filling batch tile, keeping >=2 grid steps when batch allows (v7x 2 TCs)."""
    if batch >= 512:
        return 256
    if batch >= 16:
        return _round_up((batch + 1) // 2, 8)
    return _round_up(max(batch, 1), 8)


def _make_swem_kernel(seq, batch_pad, batch_tile):
    def swem_kernel(ids_ref,   # SMEM (seq*batch_pad,) int32   [scalar prefetch, flat]
                    emb_ref,   # VMEM (vocab_pad, E_pad) f32   (resident table)
                    w1_ref,    # VMEM (E_pad, H_pad) f32       (pre-scaled by 1/seq)
                    b1_ref,    # VMEM (1, H_pad)   f32
                    w2_ref,    # VMEM (H_pad, O_pad) f32
                    b2_ref,    # VMEM (1, O_pad)   f32
                    out_ref,   # VMEM (batch_tile, O_pad) f32
                    acc_ref):  # VMEM (batch_tile, E_pad) f32  -- embedding sums
        b0 = pl.program_id(0) * batch_tile

        # Gather + sum embeddings straight out of the VMEM-resident table.
        @pl.loop(0, batch_tile)
        def _(b):
            col = b0 + b
            tok0 = ids_ref[col]                         # scalar SMEM read (s = 0)
            row0 = emb_ref[pl.ds(tok0, 1), :]           # (1, E_pad) dynamic VMEM row

            def add_row(s, acc):
                tok = ids_ref[s * batch_pad + col]
                return acc + emb_ref[pl.ds(tok, 1), :]

            # Carry the running sum in vregs; single store per batch row.
            acc_ref[pl.ds(b, 1), :] = lax.fori_loop(1, seq, add_row, row0)

        # fc1 + relu.  1/seq is folded into w1, so  acc @ w1 == mean_emb @ W1^T.
        h = jnp.dot(acc_ref[...], w1_ref[...], preferred_element_type=jnp.float32)
        h = jnp.maximum(h + b1_ref[...], 0.0)

        # fc2 (lane-dense (batch_tile, O_pad) store).
        out_ref[...] = jnp.dot(h, w2_ref[...],
                               preferred_element_type=jnp.float32) + b2_ref[...]

    return swem_kernel


def swem_forward(ids, emb_table, w1, b1, w2, b2, *, batch_tile=None):
    """ids: (seq, batch) int token ids; emb_table: (vocab, E);
    w1: (H, E), b1: (H,); w2: (O, H), b2: (O,)   (PyTorch Linear layouts)."""
    seq, batch = ids.shape
    vocab, E = emb_table.shape
    H, O = w1.shape[0], w2.shape[0]

    if batch_tile is None:
        batch_tile = _pick_batch_tile(batch)

    # Lane-dense padding: last dims -> multiples of 128, row dims -> multiples of 8.
    E_pad = _round_up(E, 128)
    H_pad = _round_up(H, 128)
    O_pad = _round_up(O, 128)
    V_pad = _round_up(vocab, 8)
    batch_pad = _round_up(batch, batch_tile)
    nb = batch_pad // batch_tile

    f32 = jnp.float32
    # Flat 1-D ids in SMEM (padded batch columns point at token 0; rows discarded).
    ids_p = jnp.pad(ids.astype(jnp.int32),
                    ((0, 0), (0, batch_pad - batch))).reshape(-1)
    emb_p = jnp.pad(emb_table.astype(f32), ((0, V_pad - vocab), (0, E_pad - E)))
    # Fold the 1/seq mean into fc1's weight (kernel only sums embeddings).
    w1_p = jnp.pad((w1.T / seq).astype(f32), ((0, E_pad - E), (0, H_pad - H)))
    b1_p = jnp.pad(b1.reshape(1, -1).astype(f32), ((0, 0), (0, H_pad - H)))
    w2_p = jnp.pad(w2.T.astype(f32), ((0, H_pad - H), (0, O_pad - O)))
    b2_p = jnp.pad(b2.reshape(1, -1).astype(f32), ((0, 0), (0, O_pad - O)))

    grid_spec = pltpu.PrefetchScalarGridSpec(
        num_scalar_prefetch=1,                       # flat ids -> SMEM
        grid=(nb,),                                  # batch tiles
        in_specs=[
            pl.BlockSpec((V_pad, E_pad), lambda b, ids: (0, 0)),   # resident table
            pl.BlockSpec((E_pad, H_pad), lambda b, ids: (0, 0)),   # w1
            pl.BlockSpec((1, H_pad),     lambda b, ids: (0, 0)),   # b1
            pl.BlockSpec((H_pad, O_pad), lambda b, ids: (0, 0)),   # w2
            pl.BlockSpec((1, O_pad),     lambda b, ids: (0, 0)),   # b2
        ],
        out_specs=pl.BlockSpec((batch_tile, O_pad), lambda b, ids: (b, 0)),
        scratch_shapes=[
            pltpu.VMEM((batch_tile, E_pad), f32),    # embedding-sum staging for matmul
        ],
    )

    # VMEM budget: default double-buffered constant blocks + output + scratch.
    tbl_bytes = V_pad * E_pad * 4
    w_bytes = (E_pad * H_pad + H_pad * O_pad + H_pad + O_pad) * 4
    vmem_needed = (2 * (tbl_bytes + w_bytes)
                   + 2 * batch_tile * O_pad * 4
                   + batch_tile * E_pad * 4
                   + (2 << 20))
    vmem_limit = int(min(128 << 20, max(32 << 20, vmem_needed)))

    cost = pl.CostEstimate(
        flops=(2 * batch_pad * E_pad * H_pad + 2 * batch_pad * H_pad * O_pad
               + seq * batch_pad * E_pad),
        transcendentals=0,
        bytes_accessed=(tbl_bytes + w_bytes            # table + weights read once
                        + seq * batch_pad * 4          # ids
                        + batch_pad * O_pad * 4),      # output
    )

    out_p = pl.pallas_call(
        _make_swem_kernel(seq, batch_pad, batch_tile),
        out_shape=jax.ShapeDtypeStruct((batch_pad, O_pad), f32),
        grid_spec=grid_spec,
        compiler_params=pltpu.CompilerParams(
            dimension_semantics=("parallel",),         # batch tiles split across TCs
            vmem_limit_bytes=vmem_limit),
        cost_estimate=cost,
    )(ids_p, emb_p, w1_p, b1_p, w2_p, b2_p)

    return out_p[:batch, :O]


def swem_reference(ids, emb_table, w1, b1, w2, b2):
    embed = jnp.take(emb_table, ids, axis=0)          # (seq, batch, E)
    embed_mean = jnp.mean(embed, axis=0)              # (batch, E)
    h = jnp.maximum(embed_mean @ w1.T + b1, 0.0)
    return h @ w2.T + b2


if __name__ == "__main__":
    # small, module-consistent shapes
    vocab_size, embedding_size, hidden_dim, num_outputs = 64, 32, 32, 2
    seq_len, batch = 8, 4

    key = jax.random.PRNGKey(0)
    k_ids, k_emb, k_w1, k_b1, k_w2, k_b2 = jax.random.split(key, 6)

    ids = jax.random.randint(k_ids, (seq_len, batch), 0, vocab_size, dtype=jnp.int32)
    emb_table = jax.random.normal(k_emb, (vocab_size, embedding_size), dtype=jnp.float32)
    lim1 = 1.0 / (embedding_size ** 0.5)
    w1 = jax.random.uniform(k_w1, (hidden_dim, embedding_size), jnp.float32, -lim1, lim1)
    b1 = jax.random.uniform(k_b1, (hidden_dim,), jnp.float32, -lim1, lim1)
    lim2 = 1.0 / (hidden_dim ** 0.5)
    w2 = jax.random.uniform(k_w2, (num_outputs, hidden_dim), jnp.float32, -lim2, lim2)
    b2 = jax.random.uniform(k_b2, (num_outputs,), jnp.float32, -lim2, lim2)

    out = jax.block_until_ready(swem_forward(ids, emb_table, w1, b1, w2, b2))

    ref = swem_reference(ids, emb_table, w1, b1, w2, b2)
    assert out.shape == (batch, num_outputs)
    assert jnp.allclose(out, ref, atol=1e-4, rtol=1e-4), float(jnp.max(jnp.abs(out - ref)))

    print("KERNEL_OK")
</pallas_src>

<mosaic_0001>
module attributes {stable_mosaic.version = 11 : i64} {
  func.func @swem_kernel(%arg0: i32, %arg1: memref<64xi32, #tpu.memory_space<smem>>, %arg2: memref<64x128xf32, #tpu.memory_space<vmem>>, %arg3: memref<128x128xf32, #tpu.memory_space<vmem>>, %arg4: memref<1x128xf32, #tpu.memory_space<vmem>>, %arg5: memref<128x128xf32, #tpu.memory_space<vmem>>, %arg6: memref<1x128xf32, #tpu.memory_space<vmem>>, %arg7: memref<8x128xf32, #tpu.memory_space<vmem>>, %arg8: memref<8x128xf32, #tpu.memory_space<vmem>>) attributes {dimension_semantics = [#tpu.dimension_semantics<parallel>], iteration_bounds = array<i64: 1>, scalar_prefetch = 1 : i64, scratch_operands = 1 : i64, tpu.core_type = #tpu.core_type<tc>, window_params = [{pipeline_mode = #tpu.pipeline_mode<synchronous>, transform_indices = @transform_0, window_bounds = array<i64: 64, 128>}, {pipeline_mode = #tpu.pipeline_mode<synchronous>, transform_indices = @transform_1, window_bounds = array<i64: 128, 128>}, {pipeline_mode = #tpu.pipeline_mode<synchronous>, transform_indices = @transform_2, window_bounds = array<i64: 1, 128>}, {pipeline_mode = #tpu.pipeline_mode<synchronous>, transform_indices = @transform_3, window_bounds = array<i64: 128, 128>}, {pipeline_mode = #tpu.pipeline_mode<synchronous>, transform_indices = @transform_4, window_bounds = array<i64: 1, 128>}, {transform_indices = @transform_5, window_bounds = array<i64: 8, 128>}]} {
    %c8_i32 = arith.constant 8 : i32
    %0 = arith.muli %arg0, %c8_i32 : i32
    %c0_i32 = arith.constant 0 : i32
    %c8_i32_0 = arith.constant 8 : i32
    %1 = arith.addi %c0_i32, %c8_i32_0 : i32
    %c1_i32 = arith.constant 1 : i32
    scf.for %arg9 = %c0_i32 to %1 step %c1_i32  : i32 {
      %c1_i32_15 = arith.constant 1 : i32
      %16 = arith.muli %arg9, %c1_i32_15 : i32
      %c0_i32_16 = arith.constant 0 : i32
      %17 = arith.addi %c0_i32_16, %16 : i32
      %18 = arith.addi %0, %17 : i32
      %19 = arith.index_cast %18 : i32 to index
      %20 = memref.load %arg1[%19] : memref<64xi32, #tpu.memory_space<smem>>
      %21 = arith.index_cast %20 : i32 to index
      %c0_17 = arith.constant 0 : index
      %22 = vector.load %arg2[%21, %c0_17] : memref<64x128xf32, #tpu.memory_space<vmem>>, vector<1x128xf32>
      %c1_i32_18 = arith.constant 1 : i32
      %c7_i32 = arith.constant 7 : i32
      %23 = arith.addi %c1_i32_18, %c7_i32 : i32
      %c1_i32_19 = arith.constant 1 : i32
      %24 = scf.for %arg10 = %c1_i32_18 to %23 step %c1_i32_19 iter_args(%arg11 = %22) -> (vector<1x128xf32>)  : i32 {
        %c8_i32_22 = arith.constant 8 : i32
        %27 = arith.muli %arg10, %c8_i32_22 : i32
        %28 = arith.addi %27, %18 : i32
        %29 = arith.index_cast %28 : i32 to index
        %30 = memref.load %arg1[%29] : memref<64xi32, #tpu.memory_space<smem>>
        %31 = arith.index_cast %30 : i32 to index
        %c0_23 = arith.constant 0 : index
        %32 = vector.load %arg2[%31, %c0_23] : memref<64x128xf32, #tpu.memory_space<vmem>>, vector<1x128xf32>
        %33 = arith.addf %arg11, %32 : vector<1x128xf32>
        scf.yield %33 : vector<1x128xf32>
      }
      %c7_i32_20 = arith.constant 7 : i32
      %25 = arith.index_cast %17 : i32 to index
      %c0_21 = arith.constant 0 : index
      %26 = vector.load %arg8[%25, %c0_21] : memref<8x128xf32, #tpu.memory_space<vmem>>, vector<1x128xf32>
      tpu.vector_store %arg8[%25, %c0_21], %24 {strides = array<i32>} : memref<8x128xf32, #tpu.memory_space<vmem>>, vector<1x128xf32>,
    }
    %c8_i32_1 = arith.constant 8 : i32
    %c0 = arith.constant 0 : index
    %c0_2 = arith.constant 0 : index
    %2 = vector.load %arg8[%c0, %c0_2] : memref<8x128xf32, #tpu.memory_space<vmem>>, vector<8x128xf32>
    %c0_3 = arith.constant 0 : index
    %c0_4 = arith.constant 0 : index
    %3 = vector.load %arg3[%c0_3, %c0_4] : memref<128x128xf32, #tpu.memory_space<vmem>>, vector<128x128xf32>
    %cst = arith.constant dense<0.000000e+00> : vector<8x128xf32>
    %4 = tpu.matmul %2, %3, %cst {dimension_numbers = #tpu.dot_dimension_numbers<[1], [0], [0], [1], [0, 0, 1, 1], [], []>} : vector<8x128xf32>, vector<128x128xf32>, vector<8x128xf32> -> vector<8x128xf32>
    %c0_5 = arith.constant 0 : index
    %c0_6 = arith.constant 0 : index
    %5 = vector.load %arg4[%c0_5, %c0_6] : memref<1x128xf32, #tpu.memory_space<vmem>>, vector<1x128xf32>
    %6 = vector.broadcast %5 : vector<1x128xf32> to vector<8x128xf32>
    %7 = arith.addf %4, %6 : vector<8x128xf32>
    %cst_7 = arith.constant 0.000000e+00 : f32
    %8 = vector.broadcast %cst_7 : f32 to vector<8x128xf32>
    %9 = arith.maximumf %7, %8 : vector<8x128xf32>
    %c0_8 = arith.constant 0 : index
    %c0_9 = arith.constant 0 : index
    %10 = vector.load %arg5[%c0_8, %c0_9] : memref<128x128xf32, #tpu.memory_space<vmem>>, vector<128x128xf32>
    %cst_10 = arith.constant dense<0.000000e+00> : vector<8x128xf32>
    %11 = tpu.matmul %9, %10, %cst_10 {dimension_numbers = #tpu.dot_dimension_numbers<[1], [0], [0], [1], [0, 0, 1, 1], [], []>} : vector<8x128xf32>, vector<128x128xf32>, vector<8x128xf32> -> vector<8x128xf32>
    %c0_11 = arith.constant 0 : index
    %c0_12 = arith.constant 0 : index
    %12 = vector.load %arg6[%c0_11, %c0_12] : memref<1x128xf32, #tpu.memory_space<vmem>>, vector<1x128xf32>
    %13 = vector.broadcast %12 : vector<1x128xf32> to vector<8x128xf32>
    %14 = arith.addf %11, %13 : vector<8x128xf32>
    %c0_13 = arith.constant 0 : index
    %c0_14 = arith.constant 0 : index
    %15 = vector.load %arg7[%c0_13, %c0_14] : memref<8x128xf32, #tpu.memory_space<vmem>>, vector<8x128xf32>
    tpu.vector_store %arg7[%c0_13, %c0_14], %14 {strides = array<i32>} : memref<8x128xf32, #tpu.memory_space<vmem>>, vector<8x128xf32>,
    return
  }
  func.func @transform_0(%arg0: i32, %arg1: memref<64xi32, #tpu.memory_space<smem>>) -> (i32, i32) {
    %c0_i32 = arith.constant 0 : i32
    %c0_i32_0 = arith.constant 0 : i32
    %c0_i32_1 = arith.constant 0 : i32
    return %c0_i32, %c0_i32_0 : i32, i32
  }
  func.func @transform_1(%arg0: i32, %arg1: memref<64xi32, #tpu.memory_space<smem>>) -> (i32, i32) {
    %c0_i32 = arith.constant 0 : i32
    %c0_i32_0 = arith.constant 0 : i32
    %c0_i32_1 = arith.constant 0 : i32
    return %c0_i32, %c0_i32_0 : i32, i32
  }
  func.func @transform_2(%arg0: i32, %arg1: memref<64xi32, #tpu.memory_space<smem>>) -> (i32, i32) {
    %c0_i32 = arith.constant 0 : i32
    %c0_i32_0 = arith.constant 0 : i32
    %c0_i32_1 = arith.constant 0 : i32
    return %c0_i32, %c0_i32_0 : i32, i32
  }
  func.func @transform_3(%arg0: i32, %arg1: memref<64xi32, #tpu.memory_space<smem>>) -> (i32, i32) {
    %c0_i32 = arith.constant 0 : i32
    %c0_i32_0 = arith.constant 0 : i32
    %c0_i32_1 = arith.constant 0 : i32
    return %c0_i32, %c0_i32_0 : i32, i32
  }
  func.func @transform_4(%arg0: i32, %arg1: memref<64xi32, #tpu.memory_space<smem>>) -> (i32, i32) {
    %c0_i32 = arith.constant 0 : i32
    %c0_i32_0 = arith.constant 0 : i32
    %c0_i32_1 = arith.constant 0 : i32
    return %c0_i32, %c0_i32_0 : i32, i32
  }
  func.func @transform_5(%arg0: i32, %arg1: memref<64xi32, #tpu.memory_space<smem>>) -> (i32, i32) {
    %c0_i32 = arith.constant 0 : i32
    %c0_i32_0 = arith.constant 0 : i32
    return %arg0, %c0_i32 : i32, i32
  }
}

</mosaic_0001>

<llo_original>
// kernel: tpu_custom_call.1
$region0: #{tpu_custom_call.1}
  #allocation0 [shape = 'u32[]', space=smem, size = 0x4, offset = 0x4, fixed_abs, tag = 'smem constant byte address 0x4 - core index']
  #allocation1 [shape = 'u32[144,128]{1,0:T(1,128)}', space=vmem, size = 0x12000, scoped, tag = 'internal scratch']
  #allocation2 [shape = 'f32[8,128]{1,0:T(8,128)}', space=vmem, size = 0x1000, scoped, tag = 'scratch operand']
  #allocation3 [shape = 's32[1]{0}', space=sflag, size = 0x4, scoped, tag = 'scoped memory for tpu_custom_call.1']
  #allocation4 [shape = 'u8[512]{0}', space=smem, size = 0x200, scoped, tag = 'prefetched SMEM operand 0']
  %s0 = inlined_call_operand.hbm [shape: s32[64], index: 0, kind: input, shape index: {}]
  %s1 = inlined_call_operand.hbm [shape: f32[64,128], index: 1, kind: input, shape index: {}]
  %s2 = inlined_call_operand.hbm [shape: f32[128,128], index: 2, kind: input, shape index: {}]
  %s3 = inlined_call_operand.vmem [shape: f32[1,128], index: 3, kind: input, shape index: {}]
  %s4 = inlined_call_operand.hbm [shape: f32[128,128], index: 4, kind: input, shape index: {}]
  %s5 = inlined_call_operand.vmem [shape: f32[1,128], index: 5, kind: input, shape index: {}]
  %s6 = inlined_call_operand.hbm [shape: f32[8,128], index: 6, kind: output, shape index: {}]
  %s7 = sld [smem:[#allocation0]]
  $region56: #{tpu_custom_call.1} parent=0
    _
  %s9 = ssub.s32 1, %s7
  %s10 = scalar_select 0, %s9, %s7
  %12 = dma.hbm_to_smem %s0, 16, [#allocation4], [#allocation3]
  %13 = dma.done [#allocation3], 16
  %14 = sfence
  $region1: #{tpu_custom_call.1} parent=0
    #allocation5 [shape = 'u8[32768]{0}', space=vmem, size = 0x8000, scoped, tag = 'input window, operand 1, single buffered']
    #allocation6 [shape = 's32[1]{0}', space=sflag, size = 0x4, scoped, tag = 'scoped memory for tpu_custom_call.1']
    #allocation7 [shape = 's32[1]{0}', space=sflag, size = 0x4, scoped, tag = 'scoped memory for tpu_custom_call.1']
    #allocation8 [shape = 'u8[65536]{0}', space=vmem, size = 0x10000, scoped, tag = 'input window, operand 2, single buffered']
    #allocation9 [shape = 's32[1]{0}', space=sflag, size = 0x4, scoped, tag = 'scoped memory for tpu_custom_call.1']
    #allocation10 [shape = 'u8[65536]{0}', space=vmem, size = 0x10000, scoped, tag = 'input window, operand 4, single buffered']
    #allocation11 [shape = 'u8[4096]{0}', space=vmem, size = 0x1000, scoped, tag = 'output window, operand 0, single buffered']
    %15 = vsyncpa [#allocation6], 0
    %16 = vsyncpa [#allocation9], 0
    %17 = vsyncpa [#allocation7], 0
    // Predicated region
    $region2: #{tpu_custom_call.1} parent=1 // pred_check
      _
    $region3: #{tpu_custom_call.1} parent=1 // pred_check_branch
      %19 = sbr.rel (0) target = $region5
    $region4: #{tpu_custom_call.1} parent=1 // pred_region
      %s21 = ssub.s32 1024, 1024
      %22 = vsyncadd [#allocation6], %s21
      %s23 = sshll.u32 [#allocation5], 4
      %s24 = int_to_ptr.vmem [resolvable:$true] %s23
      %29 = dma.hbm_to_vmem [thread:$0]  %s1, 1024, %s24, [#allocation6], 128, 128, 8
    $region5: #{tpu_custom_call.1} parent=1 // pred_fallthru
      _
    // Predicated region
    $region6: #{tpu_custom_call.1} parent=1 // pred_check
      _
    $region7: #{tpu_custom_call.1} parent=1 // pred_check_branch
      %31 = sbr.rel (0) target = $region9
    $region8: #{tpu_custom_call.1} parent=1 // pred_region
      %s33 = ssub.s32 2048, 2048
      %34 = vsyncadd [#allocation9], %s33
      %s35 = sshll.u32 [#allocation8], 4
      %s36 = int_to_ptr.vmem [resolvable:$true] %s35
      %41 = dma.hbm_to_vmem [thread:$0]  %s2, 2048, %s36, [#allocation9], 128, 128, 8
    $region9: #{tpu_custom_call.1} parent=1 // pred_fallthru
      _
    // Predicated region
    $region10: #{tpu_custom_call.1} parent=1 // pred_check
      _
    $region11: #{tpu_custom_call.1} parent=1 // pred_check_branch
      %43 = sbr.rel (0) target = $region13
    $region12: #{tpu_custom_call.1} parent=1 // pred_region
      _
    $region13: #{tpu_custom_call.1} parent=1 // pred_fallthru
      _
    // Predicated region
    $region14: #{tpu_custom_call.1} parent=1 // pred_check
      _
    $region15: #{tpu_custom_call.1} parent=1 // pred_check_branch
      %45 = sbr.rel (0) target = $region17
    $region16: #{tpu_custom_call.1} parent=1 // pred_region
      %s47 = ssub.s32 2048, 2048
      %48 = vsyncadd [#allocation9], %s47
      %s49 = sshll.u32 [#allocation10], 4
      %s50 = int_to_ptr.vmem [resolvable:$true] %s49
      %55 = dma.hbm_to_vmem [thread:$0]  %s4, 2048, %s50, [#allocation9], 128, 128, 8
    $region17: #{tpu_custom_call.1} parent=1 // pred_fallthru
      _
    // Predicated region
    $region18: #{tpu_custom_call.1} parent=1 // pred_check
      _
    $region19: #{tpu_custom_call.1} parent=1 // pred_check_branch
      %57 = sbr.rel (0) target = $region21
    $region20: #{tpu_custom_call.1} parent=1 // pred_region
      _
    $region21: #{tpu_custom_call.1} parent=1 // pred_fallthru
      _
    // Predicated region
    $region22: #{tpu_custom_call.1} parent=1 // pred_check
      _
    $region23: #{tpu_custom_call.1} parent=1 // pred_check_branch
      %59 = sbr.rel (0) target = $region25
    $region24: #{tpu_custom_call.1} parent=1 // pred_region
      %60 = dma.done [#allocation6], 1024
    $region25: #{tpu_custom_call.1} parent=1 // pred_fallthru
      _
    // Predicated region
    $region26: #{tpu_custom_call.1} parent=1 // pred_check
      _
    $region27: #{tpu_custom_call.1} parent=1 // pred_check_branch
      %62 = sbr.rel (0) target = $region29
    $region28: #{tpu_custom_call.1} parent=1 // pred_region
      %63 = dma.done [#allocation9], 2048
    $region29: #{tpu_custom_call.1} parent=1 // pred_fallthru
      _
    // Predicated region
    $region30: #{tpu_custom_call.1} parent=1 // pred_check
      _
    $region31: #{tpu_custom_call.1} parent=1 // pred_check_branch
      %65 = sbr.rel (0) target = $region33
    $region32: #{tpu_custom_call.1} parent=1 // pred_region
      %66 = dma.done [#allocation9], 2048
    $region33: #{tpu_custom_call.1} parent=1 // pred_fallthru
      _
    %s67 = smul.u32 0, 8
    loop: start=0, step=1, limit=8
    $region34: #{tpu_custom_call.1} parent=1 // loop_pre_header
      _
    $region35: #{tpu_custom_call.1} parent=1 // loop_header
      %s69 = sphi 0, %s73
      %p70 = scmp.ge.s32.totalorder %s69, 8
    $region36: #{tpu_custom_call.1} parent=1 // loop_header_branch
      %72 = sbr.rel (%p70) target = $region40
    $region37: #{tpu_custom_call.1} parent=1 // loop_body
      %s74 = sadd.s32 %s67, %s69
      %s75 = sld [smem:[#allocation4 + %s74]]
      %s76 = scalar_lea.vmem [#allocation5], %s75
      %v77 = vld [vmem:[%s76] sm:$0x1]
      loop: start=1, step=1, limit=8
      $region41: #{tpu_custom_call.1} parent=37 // loop_pre_header
        _
      $region42: #{tpu_custom_call.1} parent=37 // loop_header
        %s79 = sphi 1, %s83
        %p80 = scmp.ge.s32.totalorder %s79, 8
        %v84 = vphi %v77, %v90
      $region43: #{tpu_custom_call.1} parent=37 // loop_header_branch
        %82 = sbr.rel (%p80) target = $region47
      $region44: #{tpu_custom_call.1} parent=37 // loop_body
        %s85 = smul.u32 %s79, 8
        %s86 = sadd.s32 %s85, %s74
        %s87 = sld [smem:[#allocation4 + %s86]]
        %s88 = scalar_lea.vmem [#allocation5], %s87
        %v89 = vld [vmem:[%s88] sm:$0x1]
        %v90 = vadd.f32 %v84, %v89
      $region45: #{tpu_custom_call.1} parent=37 // loop_footer
        %s83 = sadd.s32 1, %s79
      $region46: #{tpu_custom_call.1} parent=37 // loop_footer_branch
        %78 = sbr.rel target = $region42
      $region47: #{tpu_custom_call.1} parent=37 // loop_exit
        _
      %s91 = scalar_lea.vmem [#allocation2], %s69
      %92 = vst [vmem:[%s91] sm:$0x1] %v84
    $region38: #{tpu_custom_call.1} parent=1 // loop_footer
      %s73 = sadd.s32 1, %s69
    $region39: #{tpu_custom_call.1} parent=1 // loop_footer_branch
      %68 = sbr.rel target = $region35
    $region40: #{tpu_custom_call.1} parent=1 // loop_exit
      _
    %v93 = vld [vmem:[#allocation2] sm:$0xff]
    %v94 = vld [vmem:[#allocation8] sm:$0xff]
    %v95 = vld [vmem:[#allocation8 + $0x8] sm:$0xff]
    %v96 = vld [vmem:[#allocation8 + $0x10] sm:$0xff]
    %v97 = vld [vmem:[#allocation8 + $0x18] sm:$0xff]
    %v98 = vld [vmem:[#allocation8 + $0x20] sm:$0xff]
    %v99 = vld [vmem:[#allocation8 + $0x28] sm:$0xff]
    %v100 = vld [vmem:[#allocation8 + $0x30] sm:$0xff]
    %v101 = vld [vmem:[#allocation8 + $0x38] sm:$0xff]
    %v102 = vld [vmem:[#allocation8 + $0x40] sm:$0xff]
    %v103 = vld [vmem:[#allocation8 + $0x48] sm:$0xff]
    %v104 = vld [vmem:[#allocation8 + $0x50] sm:$0xff]
    %v105 = vld [vmem:[#allocation8 + $0x58] sm:$0xff]
    %v106 = vld [vmem:[#allocation8 + $0x60] sm:$0xff]
    %v107 = vld [vmem:[#allocation8 + $0x68] sm:$0xff]
    %v108 = vld [vmem:[#allocation8 + $0x70] sm:$0xff]
    %v109 = vld [vmem:[#allocation8 + $0x78] sm:$0xff]
    %v110 = vld [vmem:[%s3] sm:$0x1]
    %v112 = vlaneseq
    %v113 = vshrl.u32 %v112, 7
    %v114 = vsub.s32 0, %v113
    %v115 = vrot.slane %v110, %v114
    %117 = vmatprep.subr.mxu0 0.0
    %118 = vmatpush1.msra.mxu0 %v109
    %119 = vmatprep.subr.mxu0 0.0
    %120 = vmatpush1.msra.mxu0 %v108
    %121 = vmatprep.subr.mxu0 0.0
    %122 = vmatpush1.msra.mxu0 %v107
    %123 = vmatprep.subr.mxu0 0.0
    %124 = vmatpush1.msra.mxu0 %v106
    %125 = vmatprep.subr.mxu0 0.0
    %126 = vmatpush1.msra.mxu0 %v105
    %127 = vmatprep.subr.mxu0 0.0
    %128 = vmatpush1.msra.mxu0 %v104
    %129 = vmatprep.subr.mxu0 0.0
    %130 = vmatpush1.msra.mxu0 %v103
    %131 = vmatprep.subr.mxu0 0.0
    %132 = vmatpush1.msra.mxu0 %v102
    %133 = vmatprep.subr.mxu0 0.0
    %134 = vmatpush1.msra.mxu0 %v101
    %135 = vmatprep.subr.mxu0 0.0
    %136 = vmatpush1.msra.mxu0 %v100
    %137 = vmatprep.subr.mxu0 0.0
    %138 = vmatpush1.msra.mxu0 %v99
    %139 = vmatprep.subr.mxu0 0.0
    %140 = vmatpush1.msra.mxu0 %v98
    %141 = vmatprep.subr.mxu0 0.0
    %142 = vmatpush1.msra.mxu0 %v97
    %143 = vmatprep.subr.mxu0 0.0
    %144 = vmatpush1.msra.mxu0 %v96
    %145 = vmatprep.subr.mxu0 0.0
    %146 = vmatpush1.msra.mxu0 %v95
    %147 = vmatprep.subr.mxu0 0.0
    %148 = vmatpush1.msra.mxu0 %v94
    %149 = vmatprep.subr.mxu0 0.0
    %150 = vmatpush2.msra.mxu0 0.0
    %151 = vmatprep.subr.mxu0 0.0
    %152 = vmatpush2.msra.mxu0 0.0
    %153 = vmatprep.subr.mxu0 0.0
    %154 = vmatpush2.msra.mxu0 0.0
    %155 = vmatprep.subr.mxu0 0.0
    %156 = vmatpush2.msra.mxu0 0.0
    %157 = vmatprep.subr.mxu0 0.0
    %158 = vmatpush2.msra.mxu0 0.0
    %159 = vmatprep.subr.mxu0 0.0
    %160 = vmatpush2.msra.mxu0 0.0
    %161 = vmatprep.subr.mxu0 0.0
    %162 = vmatpush2.msra.mxu0 0.0
    %163 = vmatprep.subr.mxu0 0.0
    %164 = vmatpush2.msra.mxu0 0.0
    %165 = vmatprep.subr.mxu0 0.0
    %166 = vmatpush2.msra.mxu0 0.0
    %167 = vmatprep.subr.mxu0 0.0
    %168 = vmatpush2.msra.mxu0 0.0
    %169 = vmatprep.subr.mxu0 0.0
    %170 = vmatpush2.msra.mxu0 0.0
    %171 = vmatprep.subr.mxu0 0.0
    %172 = vmatpush2.msra.mxu0 0.0
    %173 = vmatprep.subr.mxu0 0.0
    %174 = vmatpush2.msra.mxu0 0.0
    %175 = vmatprep.subr.mxu0 0.0
    %176 = vmatpush2.msra.mxu0 0.0
    %177 = vmatprep.subr.mxu0 0.0
    %178 = vmatpush2.msra.mxu0 0.0
    %179 = vmatprep.subr.mxu0 0.0
    %180 = vmatpush2.msra.mxu0 0.0
    %181 = vmatprep.mubr.f32.mxu0 0.0
    %182 = vmatmul.mubr.f32.gmra.mxu0 %v93
    %v183 = vpop.f32.mrf.mxu0
    %v184 = vadd.f32 %v115, %v183
    %v185 = vpop.f32.mrf.mxu0
    %186 = vdwg.mxu0
    %v187 = vmax.f32 %v184, 0.0
    %v188 = vld [vmem:[#allocation10] sm:$0xff]
    %v189 = vld [vmem:[#allocation10 + $0x8] sm:$0xff]
    %v190 = vld [vmem:[#allocation10 + $0x10] sm:$0xff]
    %v191 = vld [vmem:[#allocation10 + $0x18] sm:$0xff]
    %v192 = vld [vmem:[#allocation10 + $0x20] sm:$0xff]
    %v193 = vld [vmem:[#allocation10 + $0x28] sm:$0xff]
    %v194 = vld [vmem:[#allocation10 + $0x30] sm:$0xff]
    %v195 = vld [vmem:[#allocation10 + $0x38] sm:$0xff]
    %v196 = vld [vmem:[#allocation10 + $0x40] sm:$0xff]
    %v197 = vld [vmem:[#allocation10 + $0x48] sm:$0xff]
    %v198 = vld [vmem:[#allocation10 + $0x50] sm:$0xff]
    %v199 = vld [vmem:[#allocation10 + $0x58] sm:$0xff]
    %v200 = vld [vmem:[#allocation10 + $0x60] sm:$0xff]
    %v201 = vld [vmem:[#allocation10 + $0x68] sm:$0xff]
    %v202 = vld [vmem:[#allocation10 + $0x70] sm:$0xff]
    %v203 = vld [vmem:[#allocation10 + $0x78] sm:$0xff]
    %v204 = vld [vmem:[%s5] sm:$0x1]
    %v206 = vlaneseq
    %v207 = vshrl.u32 %v206, 7
    %v208 = vsub.s32 0, %v207
    %v209 = vrot.slane %v204, %v208
    %211 = vmatprep.subr.mxu0 0.0
    %212 = vmatpush1.msra.mxu0 %v203
    %213 = vmatprep.subr.mxu0 0.0
    %214 = vmatpush1.msra.mxu0 %v202
    %215 = vmatprep.subr.mxu0 0.0
    %216 = vmatpush1.msra.mxu0 %v201
    %217 = vmatprep.subr.mxu0 0.0
    %218 = vmatpush1.msra.mxu0 %v200
    %219 = vmatprep.subr.mxu0 0.0
    %220 = vmatpush1.msra.mxu0 %v199
    %221 = vmatprep.subr.mxu0 0.0
    %222 = vmatpush1.msra.mxu0 %v198
    %223 = vmatprep.subr.mxu0 0.0
    %224 = vmatpush1.msra.mxu0 %v197
    %225 = vmatprep.subr.mxu0 0.0
    %226 = vmatpush1.msra.mxu0 %v196
    %227 = vmatprep.subr.mxu0 0.0
    %228 = vmatpush1.msra.mxu0 %v195
    %229 = vmatprep.subr.mxu0 0.0
    %230 = vmatpush1.msra.mxu0 %v194
    %231 = vmatprep.subr.mxu0 0.0
    %232 = vmatpush1.msra.mxu0 %v193
    %233 = vmatprep.subr.mxu0 0.0
    %234 = vmatpush1.msra.mxu0 %v192
    %235 = vmatprep.subr.mxu0 0.0
    %236 = vmatpush1.msra.mxu0 %v191
    %237 = vmatprep.subr.mxu0 0.0
    %238 = vmatpush1.msra.mxu0 %v190
    %239 = vmatprep.subr.mxu0 0.0
    %240 = vmatpush1.msra.mxu0 %v189
    %241 = vmatprep.subr.mxu0 0.0
    %242 = vmatpush1.msra.mxu0 %v188
    %243 = vmatprep.subr.mxu0 0.0
    %244 = vmatpush2.msra.mxu0 0.0
    %245 = vmatprep.subr.mxu0 0.0
    %246 = vmatpush2.msra.mxu0 0.0
    %247 = vmatprep.subr.mxu0 0.0
    %248 = vmatpush2.msra.mxu0 0.0
    %249 = vmatprep.subr.mxu0 0.0
    %250 = vmatpush2.msra.mxu0 0.0
    %251 = vmatprep.subr.mxu0 0.0
    %252 = vmatpush2.msra.mxu0 0.0
    %253 = vmatprep.subr.mxu0 0.0
    %254 = vmatpush2.msra.mxu0 0.0
    %255 = vmatprep.subr.mxu0 0.0
    %256 = vmatpush2.msra.mxu0 0.0
    %257 = vmatprep.subr.mxu0 0.0
    %258 = vmatpush2.msra.mxu0 0.0
    %259 = vmatprep.subr.mxu0 0.0
    %260 = vmatpush2.msra.mxu0 0.0
    %261 = vmatprep.subr.mxu0 0.0
    %262 = vmatpush2.msra.mxu0 0.0
    %263 = vmatprep.subr.mxu0 0.0
    %264 = vmatpush2.msra.mxu0 0.0
    %265 = vmatprep.subr.mxu0 0.0
    %266 = vmatpush2.msra.mxu0 0.0
    %267 = vmatprep.subr.mxu0 0.0
    %268 = vmatpush2.msra.mxu0 0.0
    %269 = vmatprep.subr.mxu0 0.0
    %270 = vmatpush2.msra.mxu0 0.0
    %271 = vmatprep.subr.mxu0 0.0
    %272 = vmatpush2.msra.mxu0 0.0
    %273 = vmatprep.subr.mxu0 0.0
    %274 = vmatpush2.msra.mxu0 0.0
    %275 = vmatprep.mubr.f32.mxu0 0.0
    %276 = vmatmul.mubr.f32.gmra.mxu0 %v187
    %v277 = vpop.f32.mrf.mxu0
    %v278 = vadd.f32 %v209, %v277
    %v279 = vpop.f32.mrf.mxu0
    %280 = vdwg.mxu0
    %281 = vst [vmem:[#allocation11] sm:$0xff] %v278
    // Predicated region
    $region48: #{tpu_custom_call.1} parent=1 // pred_check
      _
    $region49: #{tpu_custom_call.1} parent=1 // pred_check_branch
      %283 = sbr.rel (0) target = $region51
    $region50: #{tpu_custom_call.1} parent=1 // pred_region
      %s285 = ssub.s32 128, 128
      %286 = vsyncadd [#allocation7], %s285
      %s288 = sshll.u32 [#allocation11], 4
      %s289 = int_to_ptr.vmem [resolvable:$true] %s288
      %291 = dma.vmem_to_hbm [thread:$0]  %s289, 128, %s6, [#allocation7]
    $region51: #{tpu_custom_call.1} parent=1 // pred_fallthru
      _
    // Predicated region
    $region52: #{tpu_custom_call.1} parent=1 // pred_check
      _
    $region53: #{tpu_custom_call.1} parent=1 // pred_check_branch
      %293 = sbr.rel (0) target = $region55
    $region54: #{tpu_custom_call.1} parent=1 // pred_region
      %294 = dma.done [#allocation7], 128
    $region55: #{tpu_custom_call.1} parent=1 // pred_fallthru
      _
    %295 = vsyncpa [#allocation6], 1
    %296 = vsyncpa [#allocation9], 1
    %297 = vsyncpa [#allocation7], 1

</llo_original>
